<compile_context>
chip_gen: v5e
topology: v5e:2x2
jax: 0.10.0
libtpu: 0.0.40
codegen_flags: <defaults>
</compile_context>

<pallas_src>
import functools

import numpy as np
import jax
import jax.numpy as jnp
from jax import lax
from jax.experimental import pallas as pl
from jax.experimental.pallas import tpu as pltpu


def _vmem_capacity_bytes():
    try:
        return int(pltpu.get_tpu_info().vmem_capacity_bytes)
    except Exception:
        return 64 * 1024 * 1024  # conservative: v7x per-TensorCore VMEM


def _block_footprint_bytes(c, hw, in_bytes, out_bytes):
    # 2x double-buffered input + 2x double-buffered output + ~3 f32 temporaries.
    return c * hw * (2 * in_bytes + 2 * out_bytes + 12)


# ---------------------------------------------------------------------------
# Path 1: fully fused — one (1, C, H*W) block per batch element.
# ---------------------------------------------------------------------------
def _fused_kernel(x_ref, w_ref, b_ref, o_ref, *, l2, inv_hw, eps_l2_sq, eps_in):
    """x_ref/o_ref: (1, C, HW); w_ref/b_ref: (C, 1)."""
    x = x_ref[0].astype(jnp.float32)                       # (C, HW)
    if l2:
        # F.normalize(p=2, dim=1): per-pixel L2 over channels (sublane reduce),
        # sqrt + divide fused into a single rsqrt (EUP slot).
        pix = jnp.sum(x * x, axis=0, keepdims=True)        # (1, HW)
        x = x * lax.rsqrt(jnp.maximum(pix, eps_l2_sq))
    # InstanceNorm2d: per-channel spatial stats (biased variance), lane reduce.
    mean = jnp.sum(x, axis=1, keepdims=True) * inv_hw      # (C, 1)
    xc = x - mean
    var = jnp.sum(xc * xc, axis=1, keepdims=True) * inv_hw
    scale = w_ref[...] * lax.rsqrt(var + eps_in)           # (C, 1)
    o_ref[0] = (xc * scale + b_ref[...]).astype(o_ref.dtype)


# ---------------------------------------------------------------------------
# Path 2: two-pass over HW chunks (large planes / 64 MiB-VMEM chips).
#   pass p=0: accumulate per-channel sum / sum-of-squares of L2-normalized x.
#   pass p=1: recompute L2 per chunk and apply mean / rsqrt / affine, store.
# ---------------------------------------------------------------------------
def _tiled_kernel(x_ref, w_ref, b_ref, o_ref, sum_ref, ssq_ref, *,
                  l2, inv_hw, eps_l2_sq, eps_in):
    """x_ref/o_ref: (1, C, THW); w/b: (C, 1); sum/ssq scratch: (C, 1) f32."""
    p = pl.program_id(1)
    t = pl.program_id(2)

    x = x_ref[0].astype(jnp.float32)                       # (C, THW)
    if l2:
        pix = jnp.sum(x * x, axis=0, keepdims=True)        # (1, THW)
        x = x * lax.rsqrt(jnp.maximum(pix, eps_l2_sq))

    @pl.when((p == 0) & (t == 0))
    def _():
        sum_ref[...] = jnp.zeros_like(sum_ref)
        ssq_ref[...] = jnp.zeros_like(ssq_ref)

    @pl.when(p == 0)
    def _():
        sum_ref[...] += jnp.sum(x, axis=1, keepdims=True)
        ssq_ref[...] += jnp.sum(x * x, axis=1, keepdims=True)

    @pl.when(p == 1)
    def _():
        mean = sum_ref[...] * inv_hw                       # (C, 1)
        var = jnp.maximum(ssq_ref[...] * inv_hw - mean * mean, 0.0)
        scale = w_ref[...] * lax.rsqrt(var + eps_in)
        shift = b_ref[...] - mean * scale
        o_ref[0] = (x * scale + shift).astype(o_ref.dtype)


def domain_norm(x, weight, bias, *, l2=True, eps_l2=1e-12, eps_in=1e-5,
                max_block_bytes=None):
    """x: (B, C, H, W); weight/bias: (C,). Output dtype matches x.dtype."""
    B, C, H, W = x.shape
    HW = H * W
    in_bytes = x.dtype.itemsize
    out_bytes = in_bytes

    vmem_cap = _vmem_capacity_bytes()
    if max_block_bytes is None:
        max_block_bytes = vmem_cap // 2
    vmem_limit = int(min(0.85 * vmem_cap, 120 * 1024 * 1024))

    # Lane-dense layout: fold (H, W) into the trailing (lane) axis; NO upcast.
    x2 = x.reshape(B, C, HW)
    w2 = jnp.asarray(weight, jnp.float32).reshape(C, 1)
    b2 = jnp.asarray(bias, jnp.float32).reshape(C, 1)

    kw = dict(l2=bool(l2), inv_hw=float(1.0 / HW),
              eps_l2_sq=float(eps_l2) ** 2, eps_in=float(eps_in))

    if _block_footprint_bytes(C, HW, in_bytes, out_bytes) <= max_block_bytes:
        # ---- fused single-tile path (one pass over HBM) -------------------
        out = pl.pallas_call(
            functools.partial(_fused_kernel, **kw),
            out_shape=jax.ShapeDtypeStruct((B, C, HW), x.dtype),
            grid=(B,),
            in_specs=[
                pl.BlockSpec((1, C, HW), lambda b: (b, 0, 0)),
                pl.BlockSpec((C, 1), lambda b: (0, 0)),
                pl.BlockSpec((C, 1), lambda b: (0, 0)),
            ],
            out_specs=pl.BlockSpec((1, C, HW), lambda b: (b, 0, 0)),
            compiler_params=pltpu.CompilerParams(
                dimension_semantics=("parallel",),        # megacore on v7x
                vmem_limit_bytes=vmem_limit),
            cost_estimate=pl.CostEstimate(
                flops=10 * B * C * HW,
                transcendentals=B * (HW + C),
                bytes_accessed=B * C * HW * (in_bytes + out_bytes)),
        )(x2, w2, b2)
        return out.reshape(B, C, H, W)

    # ---- tiled two-pass fallback ------------------------------------------
    # Pick the largest HW chunk that divides HW, is a multiple of 128 (lane
    # dense, satisfies the (8,128) block constraint) and fits the budget.
    t_hw = 0
    d = 128
    while d <= HW:
        if HW % d == 0 and _block_footprint_bytes(C, d, in_bytes,
                                                  out_bytes) <= max_block_bytes:
            t_hw = d
        d += 128
    if t_hw == 0:
        # TODO(synk): no 128-multiple divisor of H*W fits the budget; fall back
        # to a full-plane chunk and rely on the raised VMEM limit.
        t_hw = HW
    n_hw = HW // t_hw

    out = pl.pallas_call(
        functools.partial(_tiled_kernel, **kw),
        out_shape=jax.ShapeDtypeStruct((B, C, HW), x.dtype),
        grid=(B, 2, n_hw),
        in_specs=[
            pl.BlockSpec((1, C, t_hw), lambda b, p, t: (b, 0, t)),
            pl.BlockSpec((C, 1), lambda b, p, t: (0, 0)),
            pl.BlockSpec((C, 1), lambda b, p, t: (0, 0)),
        ],
        # Pass 0 parks the (unwritten) output window on chunk 0; pass 1 walks
        # the chunks and writes them, so only produced blocks are written back.
        out_specs=pl.BlockSpec((1, C, t_hw), lambda b, p, t: (b, 0, t * p)),
        scratch_shapes=[pltpu.VMEM((C, 1), jnp.float32),
                        pltpu.VMEM((C, 1), jnp.float32)],
        compiler_params=pltpu.CompilerParams(
            dimension_semantics=("parallel", "arbitrary", "arbitrary"),
            vmem_limit_bytes=vmem_limit),
        cost_estimate=pl.CostEstimate(
            flops=14 * B * C * HW,
            transcendentals=B * (2 * HW + C),
            bytes_accessed=B * C * HW * (2 * in_bytes + out_bytes)),
    )(x2, w2, b2)
    return out.reshape(B, C, H, W)


def domain_norm_reference(x, weight, bias, *, l2=True, eps_l2=1e-12,
                          eps_in=1e-5):
    """Pure-JAX reference with identical math (sanity check)."""
    x = x.astype(jnp.float32)
    if l2:
        norm = jnp.sqrt(jnp.sum(x * x, axis=1, keepdims=True))
        x = x / jnp.maximum(norm, eps_l2)
    mean = jnp.mean(x, axis=(2, 3), keepdims=True)
    var = jnp.mean((x - mean) ** 2, axis=(2, 3), keepdims=True)
    xhat = (x - mean) / jnp.sqrt(var + eps_in)
    return xhat * weight[None, :, None, None] + bias[None, :, None, None]


if __name__ == "__main__":
    key = jax.random.PRNGKey(0)
    k1, k2, k3 = jax.random.split(key, 3)

    B, C, H, W = 2, 4, 16, 16
    x = jax.random.normal(k1, (B, C, H, W), jnp.float32)
    weight = 1.0 + 0.1 * jax.random.normal(k2, (C,), jnp.float32)
    bias = 0.1 * jax.random.normal(k3, (C,), jnp.float32)

    ref = domain_norm_reference(x, weight, bias)

    # 1) fused single-tile path (default).
    out = jax.block_until_ready(domain_norm(x, weight, bias))
    assert out.shape == (B, C, H, W), out.shape
    assert out.dtype == x.dtype, out.dtype
    np.testing.assert_allclose(np.asarray(out), np.asarray(ref),
                               atol=2e-3, rtol=2e-3)

    # 2) tiled two-pass path (forced by shrinking the block budget).
    out_t = jax.block_until_ready(
        domain_norm(x, weight, bias, max_block_bytes=16 * 1024))
    np.testing.assert_allclose(np.asarray(out_t), np.asarray(ref),
                               atol=2e-3, rtol=2e-3)

    # 3) bf16 I/O: output dtype follows input dtype; math is still f32 inside.
    xb = x.astype(jnp.bfloat16)
    out_b = jax.block_until_ready(domain_norm(xb, weight, bias))
    assert out_b.dtype == jnp.bfloat16, out_b.dtype
    ref_b = domain_norm_reference(xb.astype(jnp.float32), weight, bias)
    np.testing.assert_allclose(np.asarray(out_b.astype(jnp.float32)),
                               np.asarray(ref_b), atol=6e-2, rtol=6e-2)

    print("KERNEL_OK")
</pallas_src>

<mosaic_0001>
module attributes {stable_mosaic.version = 11 : i64} {
  func.func @_fused_kernel(%arg0: i32, %arg1: memref<1x4x256xf32, #tpu.memory_space<vmem>>, %arg2: memref<4x1xf32, #tpu.memory_space<vmem>>, %arg3: memref<4x1xf32, #tpu.memory_space<vmem>>, %arg4: memref<1x4x256xf32, #tpu.memory_space<vmem>>) attributes {dimension_semantics = [#tpu.dimension_semantics<parallel>], iteration_bounds = array<i64: 2>, scalar_prefetch = 0 : i64, scratch_operands = 0 : i64, tpu.core_type = #tpu.core_type<tc>, window_params = [{transform_indices = @transform_0, window_bounds = array<i64: 1, 4, 256>}, {pipeline_mode = #tpu.pipeline_mode<synchronous>, transform_indices = @transform_1, window_bounds = array<i64: 4, 1>}, {pipeline_mode = #tpu.pipeline_mode<synchronous>, transform_indices = @transform_2, window_bounds = array<i64: 4, 1>}, {transform_indices = @transform_3, window_bounds = array<i64: 1, 4, 256>}]} {
    %c0 = arith.constant 0 : index
    %c0_0 = arith.constant 0 : index
    %c0_1 = arith.constant 0 : index
    %0 = vector.load %arg1[%c0, %c0_0, %c0_1] : memref<1x4x256xf32, #tpu.memory_space<vmem>>, vector<1x4x256xf32>
    %1 = vector.shape_cast %0 : vector<1x4x256xf32> to vector<4x256xf32>
    %2 = arith.mulf %1, %1 : vector<4x256xf32>
    %cst = arith.constant dense<0.000000e+00> : vector<256xf32>
    %3 = vector.multi_reduction <add>, %2, %cst [0] : vector<4x256xf32> to vector<256xf32>
    %4 = vector.shape_cast %3 : vector<256xf32> to vector<1x256xf32>
    %cst_2 = arith.constant 1.000000e-24 : f32
    %5 = vector.broadcast %cst_2 : f32 to vector<1x256xf32>
    %6 = arith.maximumf %4, %5 : vector<1x256xf32>
    %7 = math.rsqrt %6 : vector<1x256xf32>
    %8 = vector.broadcast %7 : vector<1x256xf32> to vector<4x256xf32>
    %9 = arith.mulf %1, %8 : vector<4x256xf32>
    %cst_3 = arith.constant dense<0.000000e+00> : vector<4xf32>
    %10 = vector.multi_reduction <add>, %9, %cst_3 [1] : vector<4x256xf32> to vector<4xf32>
    %11 = vector.shape_cast %10 : vector<4xf32> to vector<4x1xf32>
    %cst_4 = arith.constant 3.906250e-03 : f32
    %12 = vector.broadcast %cst_4 : f32 to vector<4x1xf32>
    %13 = arith.mulf %11, %12 : vector<4x1xf32>
    %14 = vector.broadcast %13 : vector<4x1xf32> to vector<4x256xf32>
    %15 = arith.subf %9, %14 : vector<4x256xf32>
    %16 = arith.mulf %15, %15 : vector<4x256xf32>
    %cst_5 = arith.constant dense<0.000000e+00> : vector<4xf32>
    %17 = vector.multi_reduction <add>, %16, %cst_5 [1] : vector<4x256xf32> to vector<4xf32>
    %18 = vector.shape_cast %17 : vector<4xf32> to vector<4x1xf32>
    %cst_6 = arith.constant 3.906250e-03 : f32
    %19 = vector.broadcast %cst_6 : f32 to vector<4x1xf32>
    %20 = arith.mulf %18, %19 : vector<4x1xf32>
    %c0_7 = arith.constant 0 : index
    %c0_8 = arith.constant 0 : index
    %21 = vector.load %arg2[%c0_7, %c0_8] : memref<4x1xf32, #tpu.memory_space<vmem>>, vector<4x1xf32>
    %cst_9 = arith.constant 9.99999974E-6 : f32
    %22 = vector.broadcast %cst_9 : f32 to vector<4x1xf32>
    %23 = arith.addf %20, %22 : vector<4x1xf32>
    %24 = math.rsqrt %23 : vector<4x1xf32>
    %25 = arith.mulf %21, %24 : vector<4x1xf32>
    %26 = vector.broadcast %25 : vector<4x1xf32> to vector<4x256xf32>
    %27 = arith.mulf %15, %26 : vector<4x256xf32>
    %c0_10 = arith.constant 0 : index
    %c0_11 = arith.constant 0 : index
    %28 = vector.load %arg3[%c0_10, %c0_11] : memref<4x1xf32, #tpu.memory_space<vmem>>, vector<4x1xf32>
    %29 = vector.broadcast %28 : vector<4x1xf32> to vector<4x256xf32>
    %30 = arith.addf %27, %29 : vector<4x256xf32>
    %c0_12 = arith.constant 0 : index
    %c0_13 = arith.constant 0 : index
    %c0_14 = arith.constant 0 : index
    %31 = vector.load %arg4[%c0_12, %c0_13, %c0_14] : memref<1x4x256xf32, #tpu.memory_space<vmem>>, vector<1x4x256xf32>
    %32 = vector.shape_cast %31 : vector<1x4x256xf32> to vector<4x256xf32>
    %33 = vector.shape_cast %30 : vector<4x256xf32> to vector<1x4x256xf32>
    tpu.vector_store %arg4[%c0_12, %c0_13, %c0_14], %33 {strides = array<i32>} : memref<1x4x256xf32, #tpu.memory_space<vmem>>, vector<1x4x256xf32>,
    return
  }
  func.func @transform_0(%arg0: i32) -> (i32, i32, i32) {
    %c0_i32 = arith.constant 0 : i32
    %c0_i32_0 = arith.constant 0 : i32
    %c0_i32_1 = arith.constant 0 : i32
    return %arg0, %c0_i32, %c0_i32_0 : i32, i32, i32
  }
  func.func @transform_1(%arg0: i32) -> (i32, i32) {
    %c0_i32 = arith.constant 0 : i32
    %c0_i32_0 = arith.constant 0 : i32
    %c0_i32_1 = arith.constant 0 : i32
    return %c0_i32, %c0_i32_0 : i32, i32
  }
  func.func @transform_2(%arg0: i32) -> (i32, i32) {
    %c0_i32 = arith.constant 0 : i32
    %c0_i32_0 = arith.constant 0 : i32
    %c0_i32_1 = arith.constant 0 : i32
    return %c0_i32, %c0_i32_0 : i32, i32
  }
  func.func @transform_3(%arg0: i32) -> (i32, i32, i32) {
    %c0_i32 = arith.constant 0 : i32
    %c0_i32_0 = arith.constant 0 : i32
    %c0_i32_1 = arith.constant 0 : i32
    return %arg0, %c0_i32, %c0_i32_0 : i32, i32, i32
  }
}

</mosaic_0001>

<llo_original>
// kernel: tpu_custom_call.1
$region0: #{tpu_custom_call.1}
  #allocation0 [shape = 'u32[]', space=smem, size = 0x4, offset = 0x4, fixed_abs, tag = 'smem constant byte address 0x4 - core index']
  #allocation1 [shape = 'u32[72,128]{1,0:T(1,128)}', space=vmem, size = 0x9000, scoped, tag = 'internal scratch']
  %s0 = inlined_call_operand.hbm [shape: f32[2,4,256], index: 0, kind: input, shape index: {}]
  %s1 = inlined_call_operand.vmem [shape: f32[4,1], index: 1, kind: input, shape index: {}]
  %s2 = inlined_call_operand.vmem [shape: f32[4,1], index: 2, kind: input, shape index: {}]
  %s3 = inlined_call_operand.hbm [shape: f32[2,4,256], index: 3, kind: output, shape index: {}]
  %s4 = sld [smem:[#allocation0]]
  $region49: #{tpu_custom_call.1} parent=0
    _
  %s6 = ssub.s32 1, %s4
  %s7 = scalar_select 0, %s6, %s4
  $region1: #{tpu_custom_call.1} parent=0
    #allocation2 [shape = 'u8[8192]{0}', space=vmem, size = 0x2000, scoped, tag = 'input window, operand 0']
    #allocation3 [shape = 's32[2]{0}', space=sflag, size = 0x8, scoped, tag = 'scoped memory for tpu_custom_call.1']
    #allocation4 [shape = 's32[2]{0}', space=sflag, size = 0x8, scoped, tag = 'scoped memory for tpu_custom_call.1']
    #allocation5 [shape = 'u8[8192]{0}', space=vmem, size = 0x2000, scoped, tag = 'output window, operand 0']
    %8 = vsyncpa [#allocation3], 0
    %s9 = scalar_lea.sflag [#allocation3], 1
    %10 = vsyncpa %s9, 0
    %11 = vsyncpa [#allocation4], 0
    %s12 = scalar_lea.sflag [#allocation4], 1
    %13 = vsyncpa %s12, 0
    loop: start=0, step=1, limit=4
    $region2: #{tpu_custom_call.1} parent=1 // loop_pre_header
      _
    $region3: #{tpu_custom_call.1} parent=1 // loop_header
      %s15 = sphi 0, %s19
      %p16 = scmp.ge.s32.totalorder %s15, 4
      %s25 = sphi 0, %s27
      %s28 = sphi 0, %s25
      %s29 = sphi 0, %s28
      %s45 = sphi 0, %s29
      %s49 = sphi 0, %s49
      %s51 = sphi 0, %s49
      %s52 = sphi 0, %s51
      %s66 = sphi 0, %s52
      %s70 = sphi 0, %s70
      %s72 = sphi 0, %s70
      %s73 = sphi 0, %s72
      %s87 = sphi 0, %s73
      %s93 = sphi 0, %s95
      %s96 = sphi 0, %s93
      %s97 = sphi 0, %s96
      %s113 = sphi 0, %s97
    $region4: #{tpu_custom_call.1} parent=1 // loop_header_branch
      %18 = sbr.rel (%p16) target = $region8
    $region5: #{tpu_custom_call.1} parent=1 // loop_body
      %s20 = ssub.s32 %s15, 1
      %s21 = ssub.s32 %s15, 2
      %s22 = sadd.s32 %s15, 1
      %s23 = ssub.s32 %s15, %s22
      %p24 = scmp.eq.s32.totalorder %s23, 0
      %s26 = sadd.s32 %s25, 1
      %s27 = scalar_select %p24, %s25, %s26
      %p30 = pneg %p24
      %p31 = scmp.eq.s32.totalorder %s15, 1
      %p32 = por %p30, %p31
      %p33 = scmp.ne.s32.totalorder %s25, %s28
      %p34 = scmp.eq.s32.totalorder %s15, 0
      %p35 = por %p33, %p34
      %p36 = scmp.ne.s32.totalorder %s25, %s28
      %p37 = scmp.eq.s32.totalorder %s20, 1
      %p38 = por %p36, %p37
      %p39 = scmp.ne.s32.totalorder %s28, %s29
      %p40 = scmp.eq.s32.totalorder %s20, 0
      %p41 = por %p39, %p40
      %p42 = scmp.ne.s32.totalorder %s28, %s29
      %p43 = scmp.eq.s32.totalorder %s21, 1
      %p44 = por %p42, %p43
      %p46 = scmp.ne.s32.totalorder %s29, %s45
      %p47 = scmp.eq.s32.totalorder %s21, 0
      %p48 = por %p46, %p47
      %s50 = sadd.s32 %s49, 1
      %p53 = scmp.eq.s32.totalorder %s15, 1
      %p54 = scmp.ne.s32.totalorder %s49, %s51
      %p55 = scmp.eq.s32.totalorder %s15, 0
      %p56 = por %p54, %p55
      %p57 = scmp.ne.s32.totalorder %s49, %s51
      %p58 = scmp.eq.s32.totalorder %s20, 1
      %p59 = por %p57, %p58
      %p60 = scmp.ne.s32.totalorder %s51, %s52
      %p61 = scmp.eq.s32.totalorder %s20, 0
      %p62 = por %p60, %p61
      %p63 = scmp.ne.s32.totalorder %s51, %s52
      %p64 = scmp.eq.s32.totalorder %s21, 1
      %p65 = por %p63, %p64
      %p67 = scmp.ne.s32.totalorder %s52, %s66
      %p68 = scmp.eq.s32.totalorder %s21, 0
      %p69 = por %p67, %p68
      %s71 = sadd.s32 %s70, 1
      %p74 = scmp.eq.s32.totalorder %s15, 1
      %p75 = scmp.ne.s32.totalorder %s70, %s72
      %p76 = scmp.eq.s32.totalorder %s15, 0
      %p77 = por %p75, %p76
      %p78 = scmp.ne.s32.totalorder %s70, %s72
      %p79 = scmp.eq.s32.totalorder %s20, 1
      %p80 = por %p78, %p79
      %p81 = scmp.ne.s32.totalorder %s72, %s73
      %p82 = scmp.eq.s32.totalorder %s20, 0
      %p83 = por %p81, %p82
      %p84 = scmp.ne.s32.totalorder %s72, %s73
      %p85 = scmp.eq.s32.totalorder %s21, 1
      %p86 = por %p84, %p85
      %p88 = scmp.ne.s32.totalorder %s73, %s87
      %p89 = scmp.eq.s32.totalorder %s21, 0
      %p90 = por %p88, %p89
      %s91 = ssub.s32 %s15, %s22
      %p92 = scmp.eq.s32.totalorder %s91, 0
      %s94 = sadd.s32 %s93, 1
      %s95 = scalar_select %p92, %s93, %s94
      %p98 = pneg %p92
      %p99 = scmp.eq.s32.totalorder %s15, 1
      %p100 = por %p98, %p99
      %p101 = scmp.ne.s32.totalorder %s93, %s96
      %p102 = scmp.eq.s32.totalorder %s15, 0
      %p103 = por %p101, %p102
      %p104 = scmp.ne.s32.totalorder %s93, %s96
      %p105 = scmp.eq.s32.totalorder %s20, 1
      %p106 = por %p104, %p105
      %p107 = scmp.ne.s32.totalorder %s96, %s97
      %p108 = scmp.eq.s32.totalorder %s20, 0
      %p109 = por %p107, %p108
      %p110 = scmp.ne.s32.totalorder %s96, %s97
      %p111 = scmp.eq.s32.totalorder %s21, 1
      %p112 = por %p110, %p111
      %p114 = scmp.ne.s32.totalorder %s97, %s113
      %p115 = scmp.eq.s32.totalorder %s21, 0
      %p116 = por %p114, %p115
      %p117 = scmp.le.s32.totalorder 1, %s15
      %p118 = scmp.lt.s32.totalorder %s15, 3
      %p119 = pnand %p117, %p118
      %p120 = pneg %p119
      // Predicated region
      $region9: #{tpu_custom_call.1} parent=5 // pred_check
        _
      $region10: #{tpu_custom_call.1} parent=5 // pred_check_branch
        %122 = sbr.rel (%p119) target = $region12
      $region11: #{tpu_custom_call.1} parent=5 // pred_region
        %s123 = ssub.s32 %s15, 1
        // Predicated region
        $region13: #{tpu_custom_call.1} parent=11 // pred_check
          %p124 = pneg %p62
        $region14: #{tpu_custom_call.1} parent=11 // pred_check_branch
          %126 = sbr.rel (%p124) target = $region16
        $region15: #{tpu_custom_call.1} parent=11 // pred_region
          _
        $region16: #{tpu_custom_call.1} parent=11 // pred_fallthru
          _
        // Predicated region
        $region17: #{tpu_custom_call.1} parent=11 // pred_check
          %p127 = pneg %p83
        $region18: #{tpu_custom_call.1} parent=11 // pred_check_branch
          %129 = sbr.rel (%p127) target = $region20
        $region19: #{tpu_custom_call.1} parent=11 // pred_region
          _
        $region20: #{tpu_custom_call.1} parent=11 // pred_fallthru
          _
      $region12: #{tpu_custom_call.1} parent=5 // pred_fallthru
        _
      %p130 = scmp.lt.s32.totalorder %s15, 2
      // Predicated region
      $region21: #{tpu_custom_call.1} parent=5 // pred_check
        %p131 = pneg %p130
      $region22: #{tpu_custom_call.1} parent=5 // pred_check_branch
        %133 = sbr.rel (%p131) target = $region24
      $region23: #{tpu_custom_call.1} parent=5 // pred_region
        // Predicated region
        $region25: #{tpu_custom_call.1} parent=23 // pred_check
          %p134 = pneg %p35
        $region26: #{tpu_custom_call.1} parent=23 // pred_check_branch
          %136 = sbr.rel (%p134) target = $region28
        $region27: #{tpu_custom_call.1} parent=23 // pred_region
          %s137 = sand.u32 %s25, 1
          %s138 = scalar_lea.sflag [#allocation3], %s137
          %s139 = sand.u32 %s25, 1
          %s140 = smul.addr %s139, 8
          %s141 = scalar_lea.vmem [#allocation2], %s140
          %143 = vsyncadd %s138, 0
          %s144 = smul.addr %s15, 2
          %s145 = smul.addr %s144, 4
          %s146 = scalar_lea.hbm %s0, %s145
          %s148 = sshll.u32 %s146, 4
          %s149 = int_to_ptr.hbm [resolvable:$true] %s148
          %s150 = sshll.u32 %s141, 4
          %s151 = int_to_ptr.vmem [resolvable:$true] %s150
          %153 = dma.hbm_to_vmem [thread:$0]  %s149, 128, %s151, %s138
        $region28: #{tpu_custom_call.1} parent=23 // pred_fallthru
          _
      $region24: #{tpu_custom_call.1} parent=5 // pred_fallthru
        _
      %p154 = scmp.le.s32.totalorder 1, %s15
      %p155 = scmp.lt.s32.totalorder %s15, 3
      %p156 = pnand %p154, %p155
      %p157 = pneg %p156
      // Predicated region
      $region29: #{tpu_custom_call.1} parent=5 // pred_check
        _
      $region30: #{tpu_custom_call.1} parent=5 // pred_check_branch
        %159 = sbr.rel (%p156) target = $region32
      $region31: #{tpu_custom_call.1} parent=5 // pred_region
        %s160 = ssub.s32 %s15, 1
        %s161 = sand.u32 %s28, 1
        %s162 = scalar_lea.sflag [#allocation3], %s161
        %s163 = sand.u32 %s28, 1
        %s164 = smul.addr %s163, 8
        %s165 = scalar_lea.vmem [#allocation2], %s164
        // Predicated region
        $region33: #{tpu_custom_call.1} parent=31 // pred_check
          %p166 = pneg %p41
        $region34: #{tpu_custom_call.1} parent=31 // pred_check_branch
          %168 = sbr.rel (%p166) target = $region36
        $region35: #{tpu_custom_call.1} parent=31 // pred_region
          %170 = dma.done %s162, 128
        $region36: #{tpu_custom_call.1} parent=31 // pred_fallthru
          _
        %s171 = sand.u32 %s28, 1
        %s172 = scalar_lea.sflag [#allocation3], %s171
        %s173 = sand.u32 %s28, 1
        %s174 = smul.addr %s173, 8
        %s175 = scalar_lea.vmem [#allocation2], %s174
        %p176 = pneg %p41
        %p177 = pneg %p38
        %p178 = pneg %p62
        %p179 = pneg %p59
        %p180 = pneg %p83
        %p181 = pneg %p80
        %p182 = pneg %p109
        %p183 = pneg %p106
        %s184 = sand.u32 %s96, 1
        %s185 = scalar_lea.sflag [#allocation4], %s184
        %s186 = sand.u32 %s96, 1
        %s187 = smul.addr %s186, 8
        %s188 = scalar_lea.vmem [#allocation5], %s187
        %v189 = vld [vmem:[%s165] sm:$0xff]
        %v190 = vmul.f32 %v189, %v189
        %192 = vst [vmem:[#allocation1] ss:$2 sm:$0xff] %v190
        %v193 = vld.sshfl [vmem:[#allocation1] sm:$0xff pattern:$0x75316420]
        %v194 = vld.sshfl [vmem:[#allocation1 + $0x8] sm:$0xff pattern:$0x75316420]
        %vm197 = vcmask 1043456
        %v198 = vsel %vm197, %v193, 0.0
        %v199 = vrot.slane %v198, 4
        %v200 = vadd.f32 %v198, %v199
        %v201 = vrot.slane %v200, 2
        %v202 = vadd.f32 %v200, %v201
        %v203 = vrot.slane %v202, 1
        %v204 = vadd.f32 %v202, %v203
        %v205 = vsel %vm197, %v194, 0.0
        %v206 = vrot.slane %v205, 4
        %v207 = vadd.f32 %v205, %v206
        %v208 = vrot.slane %v207, 2
        %v209 = vadd.f32 %v207, %v208
        %v210 = vrot.slane %v209, 1
        %v211 = vadd.f32 %v209, %v210
        %v212 = vmax.f32 %v204, 1e-24
        %v213 = vmax.f32 %v211, 1e-24
        %v214 = vrsqrt.pop %v212
        %v215 = vmul.f32 %v214, %v212
        %v216 = vmul.f32 %v215, %v214
        %v217 = vmul.f32 0.5, %v216
        %v218 = vsub.f32 1.5, %v217
        %v219 = vmul.f32 %v214, %v218
        %vm220 = vweird.f32 %v212
        %vm221 = vweird.f32 %v214
        %vm222 = vmor %vm220, %vm221
        %v223 = vsel %vm222, %v214, %v219
        %v224 = vrsqrt.pop %v213
        %v225 = vmul.f32 %v224, %v213
        %v226 = vmul.f32 %v225, %v224
        %v227 = vmul.f32 0.5, %v226
        %v228 = vsub.f32 1.5, %v227
        %v229 = vmul.f32 %v224, %v228
        %vm230 = vweird.f32 %v213
        %vm231 = vweird.f32 %v224
        %vm232 = vmor %vm230, %vm231
        %v233 = vsel %vm232, %v224, %v229
        %v236 = vrot.slane %v233, 4
        %v237 = vsel %vm197, %v223, %v236
        %v239 = vmul.f32 %v189, %v237
        %241 = vst [vmem:[#allocation1] ss:$2 sm:$0xff] %v239
        %v242 = vld.sshfl [vmem:[#allocation1] sm:$0xff pattern:$0x75316420]
        %v243 = vld.sshfl [vmem:[#allocation1 + $0x8] sm:$0xff pattern:$0x75316420]
        %v246 = vsel %vm197, %v242, 0.0
        %v247 = vsel %vm197, %v243, 0.0
        %v248 = vadd.f32 %v246, %v247
        %249 = vadd.xlane.f32.xlu0 %v248
        %v250 = vpop.xlane.xlu0 %249
        %v251 = vmul.f32 %v250, 0.00390625
        %v254 = vunpack.c.l.s4 839922192
        %v255 = vunpack.c.0.s8 %v254
        %v256 = vperm.slane %v251, %v255
        %v258 = vsub.f32 %v239, %v256
        %v259 = vmul.f32 %v258, %v258
        %261 = vst [vmem:[#allocation1] ss:$2 sm:$0xff] %v259
        %v262 = vld.sshfl [vmem:[#allocation1] sm:$0xff pattern:$0x75316420]
        %v263 = vld.sshfl [vmem:[#allocation1 + $0x8] sm:$0xff pattern:$0x75316420]
        %v266 = vsel %vm197, %v262, 0.0
        %v267 = vsel %vm197, %v263, 0.0
        %v268 = vadd.f32 %v266, %v267
        %269 = vadd.xlane.f32.xlu0 %v268
        %v270 = vpop.xlane.xlu0 %269
        %v271 = vmul.f32 %v270, 0.00390625
        %v272 = vld [vmem:[%s1] sm:$0xf]
        %v273 = vadd.f32 %v271, 1e-05
        %v274 = vrsqrt.pop %v273
        %v275 = vmul.f32 %v274, %v273
        %v276 = vmul.f32 %v275, %v274
        %v277 = vmul.f32 0.5, %v276
        %v278 = vsub.f32 1.5, %v277
        %v279 = vmul.f32 %v274, %v278
        %vm280 = vweird.f32 %v273
        %vm281 = vweird.f32 %v274
        %vm282 = vmor %vm280, %vm281
        %v283 = vsel %vm282, %v274, %v279
        %v284 = vmul.f32 %v272, %v283
        %286 = vset.pattern.permute.xlu0 0
        %287 = vperm.xlu0 %286, %v284
        %v288 = vpop.permute.xlu0 %287
        %v290 = vunpack.c.l.s4 839922192
        %v291 = vunpack.c.0.s8 %v290
        %v292 = vperm.slane %v288, %v291
        %v294 = vmul.f32 %v258, %v292
        %v295 = vld [vmem:[%s2] sm:$0xf]
        %297 = vset.pattern.permute.xlu0 0
        %298 = vperm.xlu0 %297, %v295
        %v299 = vpop.permute.xlu0 %298
        %v301 = vunpack.c.l.s4 839922192
        %v302 = vunpack.c.0.s8 %v301
        %v303 = vperm.slane %v299, %v302
        %v305 = vadd.f32 %v294, %v303
        %306 = vst [vmem:[%s188] sm:$0xff] %v305
        %s307 = sand.u32 %s96, 1
        %s308 = scalar_lea.sflag [#allocation4], %s307
        %s309 = sand.u32 %s96, 1
        %s310 = smul.addr %s309, 8
        %s311 = scalar_lea.vmem [#allocation5], %s310
        // Predicated region
        $region37: #{tpu_custom_call.1} parent=31 // pred_check
          %p312 = pneg %p106
        $region38: #{tpu_custom_call.1} parent=31 // pred_check_branch
          %314 = sbr.rel (%p312) target = $region40
        $region39: #{tpu_custom_call.1} parent=31 // pred_region
          %316 = vsyncadd %s308, 0
          %s317 = smul.addr %s20, 2
          %s318 = smul.addr %s317, 4
          %s319 = scalar_lea.hbm %s3, %s318
          %s321 = sshll.u32 %s311, 4
          %s322 = int_to_ptr.vmem [resolvable:$true] %s321
          %s323 = sshll.u32 %s319, 4
          %s324 = int_to_ptr.hbm [resolvable:$true] %s323
          %326 = dma.vmem_to_hbm [thread:$0]  %s322, 128, %s324, %s308
        $region40: #{tpu_custom_call.1} parent=31 // pred_fallthru
          _
      $region32: #{tpu_custom_call.1} parent=5 // pred_fallthru
        _
      %p327 = scmp.le.s32.totalorder 2, %s15
      // Predicated region
      $region41: #{tpu_custom_call.1} parent=5 // pred_check
        %p328 = pneg %p327
      $region42: #{tpu_custom_call.1} parent=5 // pred_check_branch
        %330 = sbr.rel (%p328) target = $region44
      $region43: #{tpu_custom_call.1} parent=5 // pred_region
        %s331 = ssub.s32 %s15, 2
        // Predicated region
        $region45: #{tpu_custom_call.1} parent=43 // pred_check
          %p332 = pneg %p112
        $region46: #{tpu_custom_call.1} parent=43 // pred_check_branch
          %334 = sbr.rel (%p332) target = $region48
        $region47: #{tpu_custom_call.1} parent=43 // pred_region
          %s335 = sand.u32 %s97, 1
          %s336 = scalar_lea.sflag [#allocation4], %s335
          %s337 = sand.u32 %s97, 1
          %s338 = smul.addr %s337, 8
          %s339 = scalar_lea.vmem [#allocation5], %s338
          %341 = dma.done %s336, 128
        $region48: #{tpu_custom_call.1} parent=43 // pred_fallthru
          _
      $region44: #{tpu_custom_call.1} parent=5 // pred_fallthru
        _
    $region6: #{tpu_custom_call.1} parent=1 // loop_footer
      %s19 = sadd.s32 1, %s15
    $region7: #{tpu_custom_call.1} parent=1 // loop_footer_branch
      %14 = sbr.rel target = $region3
    $region8: #{tpu_custom_call.1} parent=1 // loop_exit
      _
    %342 = vsyncpa [#allocation3], 1
    %s343 = scalar_lea.sflag [#allocation3], 1
    %344 = vsyncpa %s343, 1
    %345 = vsyncpa [#allocation4], 1
    %s346 = scalar_lea.sflag [#allocation4], 1
    %347 = vsyncpa %s346, 1

</llo_original>
